<compile_context>
chip_gen: v6e
topology: v6e:2x2x1
jax: 0.10.0
libtpu: 0.0.40
codegen_flags: <defaults>
</compile_context>

<pallas_src>
import jax
import jax.numpy as jnp
from jax.experimental import pallas as pl
from jax.experimental.pallas import tpu as pltpu


_LANE = 128       # TPU lane width (fast axis of a vreg)
_MAX_TB = 4096    # cap on the per-step batch tile (in lanes)


def actor_critic_kernel(s_ref, w1t_ref, b1t_ref, w2t_ref, b2t_ref, out_ref):
    """Fused two-head MLP, feature-major (batch on lanes).

    out^T = W2_fused^T @ relu(W1_fused^T @ state^T + b1^T) + b2^T
    """
    s = s_ref[...]                                                    # (S, TB)
    h = jnp.dot(w1t_ref[...], s, preferred_element_type=jnp.float32)  # (2H, TB)
    h = jnp.maximum(h + b1t_ref[...], 0.0)                            # f32 bias/ReLU
    h = h.astype(w2t_ref.dtype)
    out_ref[...] = (jnp.dot(w2t_ref[...], h,
                            preferred_element_type=jnp.float32)
                    + b2t_ref[...])                                   # (A+1, TB)


def _round_up(x, m):
    return ((x + m - 1) // m) * m


def _cdiv(a, b):
    return -(-a // b)


def _choose_batch_tiling(B):
    """Pick (TB, B_pad): lane-granular tile; >= 2 grid steps for big batches."""
    b_lanes = _round_up(max(B, 1), _LANE)
    n_blocks = b_lanes // _LANE
    if n_blocks <= 2:
        return b_lanes, b_lanes                       # tiny batch: single step
    n_steps = max(2, _cdiv(n_blocks, _MAX_TB // _LANE))  # >=2 for v7x megacore
    tb = _cdiv(n_blocks, n_steps) * _LANE
    return tb, n_steps * tb


def actor_critic_forward(state, params, *, min_pallas_batch=65,
                         compute_dtype=jnp.float32):
    """forward(state) -> (action_pred, value_pred) using the fused kernel."""
    B, S = state.shape
    w1t = params["w1t_fused"]   # (2H, S)
    b1t = params["b1t_fused"]   # (2H, 1)
    w2t = params["w2t_fused"]   # (A+1, 2H)
    b2t = params["b2t_fused"]   # (A+1, 1)
    N = w2t.shape[0]            # A + 1
    A = N - 1

    if B < min_pallas_batch:
        # Tiny per-env-step batch: the whole computation is a few thousand
        # FLOPs; pallas_call launch + DMA setup would be the entire cost.
        h = jnp.maximum(state @ w1t.T + b1t.T, 0.0)
        out = h @ w2t.T + b2t.T
        return out[:, :A], out[:, A:]

    # Feature-major layout: batch on lanes (lane-dense, unmasked stores, dense
    # output DMA).  Pad only to lane granularity (not a full max-size tile).
    TB, B_pad = _choose_batch_tiling(B)
    state_t = state.T                                  # (S, B) layout plumbing
    if B_pad != B:
        state_t = jnp.pad(state_t, ((0, 0), (0, B_pad - B)))

    if compute_dtype != jnp.float32:
        # Optional bf16 path (v6e/v7x): halves HBM bytes moved.  Bias-add/ReLU
        # and MXU accumulation stay in f32; breaks exact f32 parity (opt-in).
        state_t = state_t.astype(compute_dtype)
        w1t = w1t.astype(compute_dtype)
        w2t = w2t.astype(compute_dtype)

    grid = (B_pad // TB,)

    out_t = pl.pallas_call(
        actor_critic_kernel,
        out_shape=jax.ShapeDtypeStruct((N, B_pad), jnp.float32),
        grid_spec=pltpu.PrefetchScalarGridSpec(
            num_scalar_prefetch=0,
            grid=grid,
            in_specs=[
                # state^T: tiled along the batch (lane) axis, double-buffered.
                pl.BlockSpec((S, TB), lambda i: (0, i)),
                # fused weights/biases: same block every step -> VMEM-resident.
                pl.BlockSpec(w1t.shape, lambda i: (0, 0)),
                pl.BlockSpec(b1t.shape, lambda i: (0, 0)),
                pl.BlockSpec(w2t.shape, lambda i: (0, 0)),
                pl.BlockSpec(b2t.shape, lambda i: (0, 0)),
            ],
            out_specs=pl.BlockSpec((N, TB), lambda i: (0, i)),
        ),
        compiler_params=pltpu.CompilerParams(
            dimension_semantics=("parallel",),   # 2-step grid -> both TCs on v7x
        ),
    )(state_t, w1t, b1t, w2t, b2t)

    out = out_t[:, :B].T          # single slice + transpose back to (B, A+1)
    return out[:, :A], out[:, A:]


def init_params(key, state_dim, hidden_dim, n_actions):
    """PyTorch-style uniform(-1/sqrt(fan_in), 1/sqrt(fan_in)) init, then fuse."""
    def linear(k, fan_in, fan_out):
        kw, kb = jax.random.split(k)
        bound = 1.0 / jnp.sqrt(jnp.float32(fan_in))
        w = jax.random.uniform(kw, (fan_in, fan_out), jnp.float32, -bound, bound)
        b = jax.random.uniform(kb, (1, fan_out), jnp.float32, -bound, bound)
        return w, b

    k1, k2, k3, k4 = jax.random.split(key, 4)
    wa1, ba1 = linear(k1, state_dim, hidden_dim)   # actor layer 1
    wa2, ba2 = linear(k2, hidden_dim, n_actions)   # actor layer 2
    wc1, bc1 = linear(k3, state_dim, hidden_dim)   # critic layer 1
    wc2, bc2 = linear(k4, hidden_dim, 1)           # critic layer 2

    # --- host-side fusion (NOT done inside the kernel) ---
    H, A = hidden_dim, n_actions
    w1_fused = jnp.concatenate([wa1, wc1], axis=1)              # (S, 2H)
    b1_fused = jnp.concatenate([ba1, bc1], axis=1)              # (1, 2H)
    # Block-diagonal W2 with exact zeros off-diagonal (no cross-head leakage).
    w2_fused = jnp.zeros((2 * H, A + 1), jnp.float32)
    w2_fused = w2_fused.at[:H, :A].set(wa2)
    w2_fused = w2_fused.at[H:, A:].set(wc2)                     # (2H, A+1)
    b2_fused = jnp.concatenate([ba2, bc2], axis=1)              # (1, A+1)

    return dict(
        # originals (for the pure-JAX reference)
        wa1=wa1, ba1=ba1, wa2=wa2, ba2=ba2,
        wc1=wc1, bc1=bc1, wc2=wc2, bc2=bc2,
        # fused, pre-transposed to feature-major (used by the kernel)
        w1t_fused=jnp.asarray(w1_fused.T),   # (2H, S)
        b1t_fused=jnp.asarray(b1_fused.T),   # (2H, 1)
        w2t_fused=jnp.asarray(w2_fused.T),   # (A+1, 2H)
        b2t_fused=jnp.asarray(b2_fused.T),   # (A+1, 1)
    )


def reference_forward(state, p):
    """Pure-JAX reference with the unfused per-head weights."""
    h_a = jnp.maximum(state @ p["wa1"] + p["ba1"], 0.0)
    logits = h_a @ p["wa2"] + p["ba2"]
    h_c = jnp.maximum(state @ p["wc1"] + p["bc1"], 0.0)
    value = h_c @ p["wc2"] + p["bc2"]
    return logits, value


if __name__ == "__main__":
    key = jax.random.PRNGKey(0)
    k_params, k_state1, k_state2 = jax.random.split(key, 3)

    state_dim, hidden_dim, n_actions = 16, 32, 4
    params = init_params(k_params, state_dim, hidden_dim, n_actions)

    # 1) Small per-env-step batch, FORCED through the Pallas kernel
    #    (single grid step, lane-padded to 128).
    batch = 8
    state = jax.random.normal(k_state1, (batch, state_dim), dtype=jnp.float32)
    action_pred, value_pred = actor_critic_forward(state, params,
                                                   min_pallas_batch=0)
    jax.block_until_ready((action_pred, value_pred))
    ref_a, ref_v = reference_forward(state, params)
    assert action_pred.shape == (batch, n_actions)
    assert value_pred.shape == (batch, 1)
    assert jnp.allclose(action_pred, ref_a, atol=1e-4, rtol=1e-5)
    assert jnp.allclose(value_pred, ref_v, atol=1e-4, rtol=1e-5)

    # 1b) Same small batch through the default dispatch (plain-XLA fallback path).
    a_fb, v_fb = actor_critic_forward(state, params)
    jax.block_until_ready((a_fb, v_fb))
    assert jnp.allclose(a_fb, ref_a, atol=1e-4, rtol=1e-5)
    assert jnp.allclose(v_fb, ref_v, atol=1e-4, rtol=1e-5)

    # 2) Ragged rollout-sized batch: exercises lane-only padding (520 -> 768)
    #    and the 2-step parallel grid (one step per TensorCore on v7x).
    batch2 = 520
    state2 = jax.random.normal(k_state2, (batch2, state_dim), dtype=jnp.float32)
    a2, v2 = actor_critic_forward(state2, params)
    jax.block_until_ready((a2, v2))
    ra2, rv2 = reference_forward(state2, params)
    assert a2.shape == (batch2, n_actions)
    assert v2.shape == (batch2, 1)
    assert jnp.allclose(a2, ra2, atol=1e-4, rtol=1e-5)
    assert jnp.allclose(v2, rv2, atol=1e-4, rtol=1e-5)

    print("KERNEL_OK")
</pallas_src>

<mosaic_0001>
module attributes {stable_mosaic.version = 11 : i64} {
  func.func @actor_critic_kernel(%arg0: i32, %arg1: memref<16x128xf32, #tpu.memory_space<vmem>>, %arg2: memref<64x16xf32, #tpu.memory_space<vmem>>, %arg3: memref<64x1xf32, #tpu.memory_space<vmem>>, %arg4: memref<5x64xf32, #tpu.memory_space<vmem>>, %arg5: memref<5x1xf32, #tpu.memory_space<vmem>>, %arg6: memref<5x128xf32, #tpu.memory_space<vmem>>) attributes {dimension_semantics = [#tpu.dimension_semantics<parallel>], iteration_bounds = array<i64: 1>, scalar_prefetch = 0 : i64, scratch_operands = 0 : i64, tpu.core_type = #tpu.core_type<tc>, window_params = [{transform_indices = @transform_0, window_bounds = array<i64: 16, 128>}, {pipeline_mode = #tpu.pipeline_mode<synchronous>, transform_indices = @transform_1, window_bounds = array<i64: 64, 16>}, {pipeline_mode = #tpu.pipeline_mode<synchronous>, transform_indices = @transform_2, window_bounds = array<i64: 64, 1>}, {pipeline_mode = #tpu.pipeline_mode<synchronous>, transform_indices = @transform_3, window_bounds = array<i64: 5, 64>}, {pipeline_mode = #tpu.pipeline_mode<synchronous>, transform_indices = @transform_4, window_bounds = array<i64: 5, 1>}, {transform_indices = @transform_5, window_bounds = array<i64: 5, 128>}]} {
    %c0 = arith.constant 0 : index
    %c0_0 = arith.constant 0 : index
    %0 = vector.load %arg1[%c0, %c0_0] : memref<16x128xf32, #tpu.memory_space<vmem>>, vector<16x128xf32>
    %c0_1 = arith.constant 0 : index
    %c0_2 = arith.constant 0 : index
    %1 = vector.load %arg2[%c0_1, %c0_2] : memref<64x16xf32, #tpu.memory_space<vmem>>, vector<64x16xf32>
    %cst = arith.constant dense<0.000000e+00> : vector<64x128xf32>
    %2 = tpu.matmul %1, %0, %cst {dimension_numbers = #tpu.dot_dimension_numbers<[1], [0], [0], [1], [0, 0, 1, 1], [], []>} : vector<64x16xf32>, vector<16x128xf32>, vector<64x128xf32> -> vector<64x128xf32>
    %c0_3 = arith.constant 0 : index
    %c0_4 = arith.constant 0 : index
    %3 = vector.load %arg3[%c0_3, %c0_4] : memref<64x1xf32, #tpu.memory_space<vmem>>, vector<64x1xf32>
    %4 = vector.broadcast %3 : vector<64x1xf32> to vector<64x128xf32>
    %5 = arith.addf %2, %4 : vector<64x128xf32>
    %cst_5 = arith.constant 0.000000e+00 : f32
    %6 = vector.broadcast %cst_5 : f32 to vector<64x128xf32>
    %7 = arith.maximumf %5, %6 : vector<64x128xf32>
    %c0_6 = arith.constant 0 : index
    %c0_7 = arith.constant 0 : index
    %8 = vector.load %arg4[%c0_6, %c0_7] : memref<5x64xf32, #tpu.memory_space<vmem>>, vector<5x64xf32>
    %cst_8 = arith.constant dense<0.000000e+00> : vector<5x128xf32>
    %9 = tpu.matmul %8, %7, %cst_8 {dimension_numbers = #tpu.dot_dimension_numbers<[1], [0], [0], [1], [0, 0, 1, 1], [], []>} : vector<5x64xf32>, vector<64x128xf32>, vector<5x128xf32> -> vector<5x128xf32>
    %c0_9 = arith.constant 0 : index
    %c0_10 = arith.constant 0 : index
    %10 = vector.load %arg5[%c0_9, %c0_10] : memref<5x1xf32, #tpu.memory_space<vmem>>, vector<5x1xf32>
    %11 = vector.broadcast %10 : vector<5x1xf32> to vector<5x128xf32>
    %12 = arith.addf %9, %11 : vector<5x128xf32>
    %c0_11 = arith.constant 0 : index
    %c0_12 = arith.constant 0 : index
    %13 = vector.load %arg6[%c0_11, %c0_12] : memref<5x128xf32, #tpu.memory_space<vmem>>, vector<5x128xf32>
    tpu.vector_store %arg6[%c0_11, %c0_12], %12 {strides = array<i32>} : memref<5x128xf32, #tpu.memory_space<vmem>>, vector<5x128xf32>,
    return
  }
  func.func @transform_0(%arg0: i32) -> (i32, i32) {
    %c0_i32 = arith.constant 0 : i32
    %c0_i32_0 = arith.constant 0 : i32
    return %c0_i32, %arg0 : i32, i32
  }
  func.func @transform_1(%arg0: i32) -> (i32, i32) {
    %c0_i32 = arith.constant 0 : i32
    %c0_i32_0 = arith.constant 0 : i32
    %c0_i32_1 = arith.constant 0 : i32
    return %c0_i32, %c0_i32_0 : i32, i32
  }
  func.func @transform_2(%arg0: i32) -> (i32, i32) {
    %c0_i32 = arith.constant 0 : i32
    %c0_i32_0 = arith.constant 0 : i32
    %c0_i32_1 = arith.constant 0 : i32
    return %c0_i32, %c0_i32_0 : i32, i32
  }
  func.func @transform_3(%arg0: i32) -> (i32, i32) {
    %c0_i32 = arith.constant 0 : i32
    %c0_i32_0 = arith.constant 0 : i32
    %c0_i32_1 = arith.constant 0 : i32
    return %c0_i32, %c0_i32_0 : i32, i32
  }
  func.func @transform_4(%arg0: i32) -> (i32, i32) {
    %c0_i32 = arith.constant 0 : i32
    %c0_i32_0 = arith.constant 0 : i32
    %c0_i32_1 = arith.constant 0 : i32
    return %c0_i32, %c0_i32_0 : i32, i32
  }
  func.func @transform_5(%arg0: i32) -> (i32, i32) {
    %c0_i32 = arith.constant 0 : i32
    %c0_i32_0 = arith.constant 0 : i32
    return %c0_i32, %arg0 : i32, i32
  }
}

</mosaic_0001>

<llo_original>
// kernel: tpu_custom_call.1
$region0: #{tpu_custom_call.1}
  #allocation0 [shape = 'u32[]', space=smem, size = 0x4, offset = 0x4, fixed_abs, tag = 'smem constant byte address 0x4 - core index']
  #allocation1 [shape = 'u32[144,128]{1,0:T(1,128)}', space=vmem, size = 0x12000, scoped, tag = 'internal scratch']
  %s0 = inlined_call_operand.vmem [shape: f32[16,128], index: 0, kind: input, shape index: {}]
  %s1 = inlined_call_operand.vmem [shape: f32[64,16], index: 1, kind: input, shape index: {}]
  %s2 = inlined_call_operand.vmem [shape: f32[64,1], index: 2, kind: input, shape index: {}]
  %s3 = inlined_call_operand.vmem [shape: f32[5,64], index: 3, kind: input, shape index: {}]
  %s4 = inlined_call_operand.vmem [shape: f32[5,1], index: 4, kind: input, shape index: {}]
  %s5 = inlined_call_operand.hbm [shape: f32[5,128], index: 5, kind: output, shape index: {}]
  %s6 = sld [smem:[#allocation0]]
  $region30: #{tpu_custom_call.1} parent=0
    _
  %s8 = ssub.s32 1, %s6
  %s9 = scalar_select 0, %s8, %s6
  $region1: #{tpu_custom_call.1} parent=0
    #allocation2 [shape = 'u8[4096]{0}', space=vmem, size = 0x1000, scoped, tag = 'output window, operand 0, single buffered']
    #allocation3 [shape = 's32[1]{0}', space=sflag, size = 0x4, scoped, tag = 'scoped memory for tpu_custom_call.1']
    %10 = vsyncpa [#allocation3], 0
    // Predicated region
    $region2: #{tpu_custom_call.1} parent=1 // pred_check
      _
    $region3: #{tpu_custom_call.1} parent=1 // pred_check_branch
      %12 = sbr.rel (0) target = $region5
    $region4: #{tpu_custom_call.1} parent=1 // pred_region
      _
    $region5: #{tpu_custom_call.1} parent=1 // pred_fallthru
      _
    // Predicated region
    $region6: #{tpu_custom_call.1} parent=1 // pred_check
      _
    $region7: #{tpu_custom_call.1} parent=1 // pred_check_branch
      %14 = sbr.rel (0) target = $region9
    $region8: #{tpu_custom_call.1} parent=1 // pred_region
      _
    $region9: #{tpu_custom_call.1} parent=1 // pred_fallthru
      _
    // Predicated region
    $region10: #{tpu_custom_call.1} parent=1 // pred_check
      _
    $region11: #{tpu_custom_call.1} parent=1 // pred_check_branch
      %16 = sbr.rel (0) target = $region13
    $region12: #{tpu_custom_call.1} parent=1 // pred_region
      _
    $region13: #{tpu_custom_call.1} parent=1 // pred_fallthru
      _
    // Predicated region
    $region14: #{tpu_custom_call.1} parent=1 // pred_check
      _
    $region15: #{tpu_custom_call.1} parent=1 // pred_check_branch
      %18 = sbr.rel (0) target = $region17
    $region16: #{tpu_custom_call.1} parent=1 // pred_region
      _
    $region17: #{tpu_custom_call.1} parent=1 // pred_fallthru
      _
    // Predicated region
    $region18: #{tpu_custom_call.1} parent=1 // pred_check
      _
    $region19: #{tpu_custom_call.1} parent=1 // pred_check_branch
      %20 = sbr.rel (0) target = $region21
    $region20: #{tpu_custom_call.1} parent=1 // pred_region
      _
    $region21: #{tpu_custom_call.1} parent=1 // pred_fallthru
      _
    %v21 = vld [vmem:[%s0] sm:$0xff]
    %v22 = vld [vmem:[%s0 + $0x8] sm:$0xff]
    %v23 = vld [vmem:[%s1] sm:$0xff]
    %v24 = vld [vmem:[%s1 + $0x8] sm:$0xff]
    %v25 = vld [vmem:[%s1 + $0x10] sm:$0xff]
    %v26 = vld [vmem:[%s1 + $0x18] sm:$0xff]
    %v27 = vld [vmem:[%s1 + $0x20] sm:$0xff]
    %v28 = vld [vmem:[%s1 + $0x28] sm:$0xff]
    %v29 = vld [vmem:[%s1 + $0x30] sm:$0xff]
    %v30 = vld [vmem:[%s1 + $0x38] sm:$0xff]
    %v31 = vld [vmem:[%s2] sm:$0xff]
    %v32 = vld [vmem:[%s2 + $0x8] sm:$0xff]
    %v33 = vld [vmem:[%s2 + $0x10] sm:$0xff]
    %v34 = vld [vmem:[%s2 + $0x18] sm:$0xff]
    %v35 = vld [vmem:[%s2 + $0x20] sm:$0xff]
    %v36 = vld [vmem:[%s2 + $0x28] sm:$0xff]
    %v37 = vld [vmem:[%s2 + $0x30] sm:$0xff]
    %v38 = vld [vmem:[%s2 + $0x38] sm:$0xff]
    %40 = vset.pattern.permute.xlu0 0
    %41 = vperm.xlu0 %40, %v31
    %v42 = vpop.permute.xlu0 %41
    %45 = vset.pattern.permute.xlu0 0
    %46 = vperm.xlu0 %45, %v32
    %v47 = vpop.permute.xlu0 %46
    %50 = vset.pattern.permute.xlu0 0
    %51 = vperm.xlu0 %50, %v33
    %v52 = vpop.permute.xlu0 %51
    %55 = vset.pattern.permute.xlu0 0
    %56 = vperm.xlu0 %55, %v34
    %v57 = vpop.permute.xlu0 %56
    %60 = vset.pattern.permute.xlu0 0
    %61 = vperm.xlu0 %60, %v35
    %v62 = vpop.permute.xlu0 %61
    %65 = vset.pattern.permute.xlu0 0
    %66 = vperm.xlu0 %65, %v36
    %v67 = vpop.permute.xlu0 %66
    %70 = vset.pattern.permute.xlu0 0
    %71 = vperm.xlu0 %70, %v37
    %v72 = vpop.permute.xlu0 %71
    %75 = vset.pattern.permute.xlu0 0
    %76 = vperm.xlu0 %75, %v38
    %v77 = vpop.permute.xlu0 %76
    %vm79 = vcmask 130048
    %v81 = vsel %vm79, %v23, 0
    %v84 = vsel %vm79, %v24, 0
    %v87 = vsel %vm79, %v25, 0
    %v90 = vsel %vm79, %v26, 0
    %v93 = vsel %vm79, %v27, 0
    %v96 = vsel %vm79, %v28, 0
    %v99 = vsel %vm79, %v29, 0
    %v102 = vsel %vm79, %v30, 0
    %104 = vmatprep.subr.mxu0 0.0
    %105 = vmatpush1.msra.mxu0 0.0
    %106 = vmatprep.subr.mxu0 0.0
    %107 = vmatpush1.msra.mxu0 0.0
    %108 = vmatprep.subr.mxu0 0.0
    %109 = vmatpush1.msra.mxu0 0.0
    %110 = vmatprep.subr.mxu0 0.0
    %111 = vmatpush1.msra.mxu0 0.0
    %112 = vmatprep.subr.mxu0 0.0
    %113 = vmatpush1.msra.mxu0 0.0
    %114 = vmatprep.subr.mxu0 0.0
    %115 = vmatpush1.msra.mxu0 0.0
    %116 = vmatprep.subr.mxu0 0.0
    %117 = vmatpush1.msra.mxu0 0.0
    %118 = vmatprep.subr.mxu0 0.0
    %119 = vmatpush1.msra.mxu0 0.0
    %120 = vmatprep.subr.mxu0 0.0
    %121 = vmatpush1.msra.mxu0 0.0
    %122 = vmatprep.subr.mxu0 0.0
    %123 = vmatpush1.msra.mxu0 0.0
    %124 = vmatprep.subr.mxu0 0.0
    %125 = vmatpush1.msra.mxu0 0.0
    %126 = vmatprep.subr.mxu0 0.0
    %127 = vmatpush1.msra.mxu0 0.0
    %128 = vmatprep.subr.mxu0 0.0
    %129 = vmatpush1.msra.mxu0 0.0
    %130 = vmatprep.subr.mxu0 0.0
    %131 = vmatpush1.msra.mxu0 0.0
    %132 = vmatprep.subr.mxu0 0.0
    %133 = vmatpush1.msra.mxu0 %v22
    %134 = vmatprep.subr.mxu0 0.0
    %135 = vmatpush1.msra.mxu0 %v21
    %136 = vmatprep.subr.mxu0 0.0
    %137 = vmatpush2.msra.mxu0 0.0
    %138 = vmatprep.subr.mxu0 0.0
    %139 = vmatpush2.msra.mxu0 0.0
    %140 = vmatprep.subr.mxu0 0.0
    %141 = vmatpush2.msra.mxu0 0.0
    %142 = vmatprep.subr.mxu0 0.0
    %143 = vmatpush2.msra.mxu0 0.0
    %144 = vmatprep.subr.mxu0 0.0
    %145 = vmatpush2.msra.mxu0 0.0
    %146 = vmatprep.subr.mxu0 0.0
    %147 = vmatpush2.msra.mxu0 0.0
    %148 = vmatprep.subr.mxu0 0.0
    %149 = vmatpush2.msra.mxu0 0.0
    %150 = vmatprep.subr.mxu0 0.0
    %151 = vmatpush2.msra.mxu0 0.0
    %152 = vmatprep.subr.mxu0 0.0
    %153 = vmatpush2.msra.mxu0 0.0
    %154 = vmatprep.subr.mxu0 0.0
    %155 = vmatpush2.msra.mxu0 0.0
    %156 = vmatprep.subr.mxu0 0.0
    %157 = vmatpush2.msra.mxu0 0.0
    %158 = vmatprep.subr.mxu0 0.0
    %159 = vmatpush2.msra.mxu0 0.0
    %160 = vmatprep.subr.mxu0 0.0
    %161 = vmatpush2.msra.mxu0 0.0
    %162 = vmatprep.subr.mxu0 0.0
    %163 = vmatpush2.msra.mxu0 0.0
    %164 = vmatprep.subr.mxu0 0.0
    %165 = vmatpush2.msra.mxu0 0.0
    %166 = vmatprep.subr.mxu0 0.0
    %167 = vmatpush2.msra.mxu0 0.0
    %168 = vmatprep.mubr.f32.mxu0 0.0
    %169 = vmatmul.mubr.f32.gmra.mxu0 %v81
    %v170 = vpop.f32.mrf.mxu0
    %v171 = vadd.f32 %v42, %v170
    %v172 = vpop.f32.mrf.mxu0
    %173 = vmatprep.mubr.f32.mxu0 0.0
    %174 = vmatmul.mubr.f32.gmra.mxu0 %v84
    %v175 = vpop.f32.mrf.mxu0
    %v176 = vadd.f32 %v47, %v175
    %v177 = vpop.f32.mrf.mxu0
    %178 = vmatprep.mubr.f32.mxu0 0.0
    %179 = vmatmul.mubr.f32.gmra.mxu0 %v87
    %v180 = vpop.f32.mrf.mxu0
    %v181 = vadd.f32 %v52, %v180
    %v182 = vpop.f32.mrf.mxu0
    %183 = vmatprep.mubr.f32.mxu0 0.0
    %184 = vmatmul.mubr.f32.gmra.mxu0 %v90
    %v185 = vpop.f32.mrf.mxu0
    %v186 = vadd.f32 %v57, %v185
    %v187 = vpop.f32.mrf.mxu0
    %188 = vmatprep.mubr.f32.mxu0 0.0
    %189 = vmatmul.mubr.f32.gmra.mxu0 %v93
    %v190 = vpop.f32.mrf.mxu0
    %v191 = vadd.f32 %v62, %v190
    %v192 = vpop.f32.mrf.mxu0
    %193 = vmatprep.mubr.f32.mxu0 0.0
    %194 = vmatmul.mubr.f32.gmra.mxu0 %v96
    %v195 = vpop.f32.mrf.mxu0
    %v196 = vadd.f32 %v67, %v195
    %v197 = vpop.f32.mrf.mxu0
    %198 = vmatprep.mubr.f32.mxu0 0.0
    %199 = vmatmul.mubr.f32.gmra.mxu0 %v99
    %v200 = vpop.f32.mrf.mxu0
    %v201 = vadd.f32 %v72, %v200
    %v202 = vpop.f32.mrf.mxu0
    %203 = vmatprep.mubr.f32.mxu0 0.0
    %204 = vmatmul.mubr.f32.gmra.mxu0 %v102
    %v205 = vpop.f32.mrf.mxu0
    %v206 = vadd.f32 %v77, %v205
    %v207 = vpop.f32.mrf.mxu0
    %208 = vdwg.mxu0
    %v209 = vmax.f32 %v171, 0.0
    %v210 = vmax.f32 %v176, 0.0
    %v211 = vmax.f32 %v181, 0.0
    %v212 = vmax.f32 %v186, 0.0
    %v213 = vmax.f32 %v191, 0.0
    %v214 = vmax.f32 %v196, 0.0
    %v215 = vmax.f32 %v201, 0.0
    %v216 = vmax.f32 %v206, 0.0
    %v217 = vld [vmem:[%s3] sm:$0x1f]
    %v218 = vld [vmem:[%s4] sm:$0x1f]
    %220 = vset.pattern.permute.xlu0 0
    %221 = vperm.xlu0 %220, %v218
    %v222 = vpop.permute.xlu0 %221
    %vm224 = vcmask 523264
    %v226 = vsel %vm224, %v217, 0
    %228 = vmatprep.subr.mxu0 0.0
    %229 = vmatpush1.msra.mxu0 0.0
    %230 = vmatprep.subr.mxu0 0.0
    %231 = vmatpush1.msra.mxu0 0.0
    %232 = vmatprep.subr.mxu0 0.0
    %233 = vmatpush1.msra.mxu0 0.0
    %234 = vmatprep.subr.mxu0 0.0
    %235 = vmatpush1.msra.mxu0 0.0
    %236 = vmatprep.subr.mxu0 0.0
    %237 = vmatpush1.msra.mxu0 0.0
    %238 = vmatprep.subr.mxu0 0.0
    %239 = vmatpush1.msra.mxu0 0.0
    %240 = vmatprep.subr.mxu0 0.0
    %241 = vmatpush1.msra.mxu0 0.0
    %242 = vmatprep.subr.mxu0 0.0
    %243 = vmatpush1.msra.mxu0 0.0
    %244 = vmatprep.subr.mxu0 0.0
    %245 = vmatpush1.msra.mxu0 %v216
    %246 = vmatprep.subr.mxu0 0.0
    %247 = vmatpush1.msra.mxu0 %v215
    %248 = vmatprep.subr.mxu0 0.0
    %249 = vmatpush1.msra.mxu0 %v214
    %250 = vmatprep.subr.mxu0 0.0
    %251 = vmatpush1.msra.mxu0 %v213
    %252 = vmatprep.subr.mxu0 0.0
    %253 = vmatpush1.msra.mxu0 %v212
    %254 = vmatprep.subr.mxu0 0.0
    %255 = vmatpush1.msra.mxu0 %v211
    %256 = vmatprep.subr.mxu0 0.0
    %257 = vmatpush1.msra.mxu0 %v210
    %258 = vmatprep.subr.mxu0 0.0
    %259 = vmatpush1.msra.mxu0 %v209
    %260 = vmatprep.subr.mxu0 0.0
    %261 = vmatpush2.msra.mxu0 0.0
    %262 = vmatprep.subr.mxu0 0.0
    %263 = vmatpush2.msra.mxu0 0.0
    %264 = vmatprep.subr.mxu0 0.0
    %265 = vmatpush2.msra.mxu0 0.0
    %266 = vmatprep.subr.mxu0 0.0
    %267 = vmatpush2.msra.mxu0 0.0
    %268 = vmatprep.subr.mxu0 0.0
    %269 = vmatpush2.msra.mxu0 0.0
    %270 = vmatprep.subr.mxu0 0.0
    %271 = vmatpush2.msra.mxu0 0.0
    %272 = vmatprep.subr.mxu0 0.0
    %273 = vmatpush2.msra.mxu0 0.0
    %274 = vmatprep.subr.mxu0 0.0
    %275 = vmatpush2.msra.mxu0 0.0
    %276 = vmatprep.subr.mxu0 0.0
    %277 = vmatpush2.msra.mxu0 0.0
    %278 = vmatprep.subr.mxu0 0.0
    %279 = vmatpush2.msra.mxu0 0.0
    %280 = vmatprep.subr.mxu0 0.0
    %281 = vmatpush2.msra.mxu0 0.0
    %282 = vmatprep.subr.mxu0 0.0
    %283 = vmatpush2.msra.mxu0 0.0
    %284 = vmatprep.subr.mxu0 0.0
    %285 = vmatpush2.msra.mxu0 0.0
    %286 = vmatprep.subr.mxu0 0.0
    %287 = vmatpush2.msra.mxu0 0.0
    %288 = vmatprep.subr.mxu0 0.0
    %289 = vmatpush2.msra.mxu0 0.0
    %290 = vmatprep.subr.mxu0 0.0
    %291 = vmatpush2.msra.mxu0 0.0
    %292 = vmatprep.mubr.f32.mxu0 0.0
    %293 = vmatmul.mubr.f32.gmra.mxu0 %v226
    %v294 = vpop.f32.mrf.mxu0
    %v295 = vadd.f32 %v222, %v294
    %v296 = vpop.f32.mrf.mxu0
    %297 = vdwg.mxu0
    %298 = vst [vmem:[#allocation2] sm:$0x1f] %v295
    // Predicated region
    $region22: #{tpu_custom_call.1} parent=1 // pred_check
      _
    $region23: #{tpu_custom_call.1} parent=1 // pred_check_branch
      %300 = sbr.rel (0) target = $region25
    $region24: #{tpu_custom_call.1} parent=1 // pred_region
      %s302 = ssub.s32 128, 128
      %303 = vsyncadd [#allocation3], %s302
      %s305 = sshll.u32 [#allocation2], 4
      %s306 = int_to_ptr.vmem [resolvable:$true] %s305
      %308 = dma.vmem_to_hbm [thread:$0]  %s306, 128, %s5, [#allocation3]
    $region25: #{tpu_custom_call.1} parent=1 // pred_fallthru
      _
    // Predicated region
    $region26: #{tpu_custom_call.1} parent=1 // pred_check
      _
    $region27: #{tpu_custom_call.1} parent=1 // pred_check_branch
      %310 = sbr.rel (0) target = $region29
    $region28: #{tpu_custom_call.1} parent=1 // pred_region
      %311 = dma.done [#allocation3], 128
    $region29: #{tpu_custom_call.1} parent=1 // pred_fallthru
      _
    %312 = vsyncpa [#allocation3], 1

</llo_original>
